<compile_context>
chip_gen: v7x
topology: tpu7x:2x2x1
jax: 0.10.0
libtpu: 0.0.40
codegen_flags: <defaults>
</compile_context>

<pallas_src>
import jax
import jax.numpy as jnp
from jax.experimental import pallas as pl
from jax.experimental.pallas import tpu as pltpu

LANE = 128  # TPU lane width; all node/feature axes are zero-padded to this.

# Param-slab row layout (all 8-sublane aligned starts).
_W1_ROW, _W2_ROW, _B1_ROW, _B2_ROW, _P_ROWS = 0, 128, 256, 264, 272
# Graph/feature-slab row layout.
_A_ROW, _X_ROW, _GX_ROWS = 0, 128, 256


def _gcn_fused_kernel(gx_ref, p_ref, o_ref):
    """Both GraphConv layers fused; hidden activation never leaves registers/VMEM values.

    gx_ref: (256,128) slab -- rows [0,128) = A_norm (zero-padded, [dst,src]),
                              rows [128,256) = node features (zero-padded)
    p_ref:  (272,128) slab -- rows [0,128) = W1, [128,256) = W2,
                              row 256 = b1, row 264 = b2 (all zero-padded)
    o_ref:  (8,128) lane-dense output slab (real data in [:N, :OUT])
    """
    a = gx_ref[_A_ROW:_A_ROW + LANE, :]          # (128,128)
    x = gx_ref[_X_ROW:_X_ROW + LANE, :]          # (128,128)
    w1 = p_ref[_W1_ROW:_W1_ROW + LANE, :]
    w2 = p_ref[_W2_ROW:_W2_ROW + LANE, :]
    b1 = p_ref[_B1_ROW:_B1_ROW + 1, :]           # (1,128)
    b2 = p_ref[_B2_ROW:_B2_ROW + 1, :]           # (1,128)

    # ---- layer 0: relu(A_norm @ X @ W1 + b1) --------------------------------
    ax = jnp.dot(a, x, preferred_element_type=jnp.float32)
    h = jnp.maximum(jnp.dot(ax, w1, preferred_element_type=jnp.float32) + b1, 0.0)
    # Padded rows of h contain relu(b1); they are annihilated below because the
    # corresponding (padded) columns of A_norm are zero.
    # dropout(0.5) in eval mode == identity.
    # TODO(synk): training-mode dropout (random mask + 1/(1-p) rescale) not implemented.

    # ---- layer 1: A_norm @ (h @ W2) + b2 (no activation) --------------------
    hw = jnp.dot(h, w2, preferred_element_type=jnp.float32)
    o = jnp.dot(a, hw, preferred_element_type=jnp.float32) + b2
    o_ref[...] = o[: o_ref.shape[0], :].astype(o_ref.dtype)


def pack_params(w1, b1, w2, b2):
    """Pack all GraphConv weights/biases into ONE lane-dense f32 slab (done once)."""
    assert w1.shape[0] <= LANE and w1.shape[1] <= LANE
    assert w2.shape[0] <= LANE and w2.shape[1] <= LANE
    p = jnp.zeros((_P_ROWS, LANE), jnp.float32)
    p = p.at[_W1_ROW:_W1_ROW + w1.shape[0], : w1.shape[1]].set(w1)
    p = p.at[_W2_ROW:_W2_ROW + w2.shape[0], : w2.shape[1]].set(w2)
    p = p.at[_B1_ROW, : b1.shape[0]].set(b1)
    p = p.at[_B2_ROW, : b2.shape[0]].set(b2)
    return p


def pack_graph_features(a_norm, features):
    """Pack the pre-normalized aggregation matrix and node features into ONE slab."""
    n = a_norm.shape[0]
    assert n <= LANE and features.shape[1] <= LANE
    gx = jnp.zeros((_GX_ROWS, LANE), jnp.float32)
    gx = gx.at[_A_ROW:_A_ROW + n, :n].set(a_norm.astype(jnp.float32))
    gx = gx.at[_X_ROW:_X_ROW + features.shape[0], : features.shape[1]].set(
        features.astype(jnp.float32))
    return gx


def gcn_forward(gx_slab, p_slab, *, num_nodes, out_size):
    """GCN.forward: GraphConv(relu) -> dropout(identity in eval) -> GraphConv."""
    n_rows = max(8, ((num_nodes + 7) // 8) * 8)  # sublane-aligned output rows

    # 4 full 128^3 MXU passes; 2 input slabs + 1 lane-dense output slab of bytes.
    flops = 4 * 2 * LANE ** 3
    itemsize = jnp.dtype(jnp.float32).itemsize
    bytes_accessed = itemsize * (gx_slab.size + p_slab.size + n_rows * LANE)
    cost = pl.CostEstimate(flops=flops, transcendentals=0,
                           bytes_accessed=bytes_accessed)

    out_pad = pl.pallas_call(
        _gcn_fused_kernel,
        out_shape=jax.ShapeDtypeStruct((n_rows, LANE), jnp.float32),
        grid=(1,),
        in_specs=[
            pl.BlockSpec(gx_slab.shape, lambda i: (0, 0)),
            pl.BlockSpec(p_slab.shape, lambda i: (0, 0)),
        ],
        out_specs=pl.BlockSpec((n_rows, LANE), lambda i: (0, 0)),
        cost_estimate=cost,
        compiler_params=pltpu.CompilerParams(
            dimension_semantics=("arbitrary",)),
    )(gx_slab, p_slab)
    return out_pad[:num_nodes, :out_size]


def _glorot(key, shape):
    fan_in, fan_out = shape
    limit = (6.0 / (fan_in + fan_out)) ** 0.5
    return jax.random.uniform(key, shape, jnp.float32, -limit, limit)


if __name__ == "__main__":
    # Small synthetic problem: N=8 nodes, in_size=16, hid_size=32, out_size=8.
    N, IN, HID, OUT = 8, 16, 32, 8
    key = jax.random.PRNGKey(0)
    k_adj, k_feat, k_w1, k_w2 = jax.random.split(key, 4)

    # Deterministic random directed graph; self-loops ensure in-degree >= 1.
    adj = (jax.random.uniform(k_adj, (N, N)) < 0.3).astype(jnp.float32)
    adj = jnp.maximum(adj, jnp.eye(N, dtype=jnp.float32))      # A[src, dst]

    # Graph-construction-time preprocessing (amortized over all forward calls):
    # A_norm[dst, src] = A^T with right-norm 1/in_deg folded in.
    a_agg = adj.T
    in_deg = jnp.clip(jnp.sum(a_agg, axis=1), 1.0, None)
    a_norm = a_agg / in_deg[:, None]

    features = jax.random.normal(k_feat, (N, IN), jnp.float32)

    # GraphConv params: xavier_uniform weights, zero biases (DGL defaults).
    w1 = _glorot(k_w1, (IN, HID))
    b1 = jnp.zeros((HID,), jnp.float32)
    w2 = _glorot(k_w2, (HID, OUT))
    b2 = jnp.zeros((OUT,), jnp.float32)

    # Pack once (params) / per graph+call (A_norm, features).
    p_slab = pack_params(w1, b1, w2, b2)
    gx_slab = pack_graph_features(a_norm, features)

    out = gcn_forward(gx_slab, p_slab, num_nodes=N, out_size=OUT)
    out = jax.block_until_ready(out)

    # Independent pure-JAX reference with the UN-folded DGL norm='right' math
    # (aggregate with adj.T, then divide by clamped in-degree), eval dropout.
    h_ref = jnp.maximum((adj.T @ (features @ w1)) / in_deg[:, None] + b1[None, :], 0.0)
    o_ref = (adj.T @ (h_ref @ w2)) / in_deg[:, None] + b2[None, :]

    assert out.shape == (N, OUT)
    assert jnp.allclose(out, o_ref, atol=1e-4, rtol=1e-4)

    print("KERNEL_OK")
</pallas_src>

<mosaic_0001>
module attributes {stable_mosaic.version = 11 : i64} {
  func.func @_gcn_fused_kernel(%arg0: i32, %arg1: memref<256x128xf32, #tpu.memory_space<vmem>>, %arg2: memref<272x128xf32, #tpu.memory_space<vmem>>, %arg3: memref<8x128xf32, #tpu.memory_space<vmem>>) attributes {dimension_semantics = [#tpu.dimension_semantics<arbitrary>], iteration_bounds = array<i64: 1>, scalar_prefetch = 0 : i64, scratch_operands = 0 : i64, tpu.core_type = #tpu.core_type<tc>, window_params = [{pipeline_mode = #tpu.pipeline_mode<synchronous>, transform_indices = @transform_0, window_bounds = array<i64: 256, 128>}, {pipeline_mode = #tpu.pipeline_mode<synchronous>, transform_indices = @transform_1, window_bounds = array<i64: 272, 128>}, {pipeline_mode = #tpu.pipeline_mode<synchronous>, transform_indices = @transform_2, window_bounds = array<i64: 8, 128>}]} {
    %c0 = arith.constant 0 : index
    %c0_0 = arith.constant 0 : index
    %0 = vector.load %arg1[%c0, %c0_0] : memref<256x128xf32, #tpu.memory_space<vmem>>, vector<128x128xf32>
    %c128 = arith.constant 128 : index
    %c0_1 = arith.constant 0 : index
    %1 = vector.load %arg1[%c128, %c0_1] : memref<256x128xf32, #tpu.memory_space<vmem>>, vector<128x128xf32>
    %c0_2 = arith.constant 0 : index
    %c0_3 = arith.constant 0 : index
    %2 = vector.load %arg2[%c0_2, %c0_3] : memref<272x128xf32, #tpu.memory_space<vmem>>, vector<128x128xf32>
    %c128_4 = arith.constant 128 : index
    %c0_5 = arith.constant 0 : index
    %3 = vector.load %arg2[%c128_4, %c0_5] : memref<272x128xf32, #tpu.memory_space<vmem>>, vector<128x128xf32>
    %c256 = arith.constant 256 : index
    %c0_6 = arith.constant 0 : index
    %4 = vector.load %arg2[%c256, %c0_6] : memref<272x128xf32, #tpu.memory_space<vmem>>, vector<1x128xf32>
    %c264 = arith.constant 264 : index
    %c0_7 = arith.constant 0 : index
    %5 = vector.load %arg2[%c264, %c0_7] : memref<272x128xf32, #tpu.memory_space<vmem>>, vector<1x128xf32>
    %cst = arith.constant dense<0.000000e+00> : vector<128x128xf32>
    %6 = tpu.matmul %0, %1, %cst {dimension_numbers = #tpu.dot_dimension_numbers<[1], [0], [0], [1], [0, 0, 1, 1], [], []>} : vector<128x128xf32>, vector<128x128xf32>, vector<128x128xf32> -> vector<128x128xf32>
    %cst_8 = arith.constant dense<0.000000e+00> : vector<128x128xf32>
    %7 = tpu.matmul %6, %2, %cst_8 {dimension_numbers = #tpu.dot_dimension_numbers<[1], [0], [0], [1], [0, 0, 1, 1], [], []>} : vector<128x128xf32>, vector<128x128xf32>, vector<128x128xf32> -> vector<128x128xf32>
    %8 = vector.broadcast %4 : vector<1x128xf32> to vector<128x128xf32>
    %9 = arith.addf %7, %8 : vector<128x128xf32>
    %cst_9 = arith.constant 0.000000e+00 : f32
    %10 = vector.broadcast %cst_9 : f32 to vector<128x128xf32>
    %11 = arith.maximumf %9, %10 : vector<128x128xf32>
    %cst_10 = arith.constant dense<0.000000e+00> : vector<128x128xf32>
    %12 = tpu.matmul %11, %3, %cst_10 {dimension_numbers = #tpu.dot_dimension_numbers<[1], [0], [0], [1], [0, 0, 1, 1], [], []>} : vector<128x128xf32>, vector<128x128xf32>, vector<128x128xf32> -> vector<128x128xf32>
    %cst_11 = arith.constant dense<0.000000e+00> : vector<128x128xf32>
    %13 = tpu.matmul %0, %12, %cst_11 {dimension_numbers = #tpu.dot_dimension_numbers<[1], [0], [0], [1], [0, 0, 1, 1], [], []>} : vector<128x128xf32>, vector<128x128xf32>, vector<128x128xf32> -> vector<128x128xf32>
    %14 = vector.broadcast %5 : vector<1x128xf32> to vector<128x128xf32>
    %15 = arith.addf %13, %14 : vector<128x128xf32>
    %16 = vector.extract_strided_slice %15 {offsets = [0, 0], sizes = [8, 128], strides = [1, 1]} : vector<128x128xf32> to vector<8x128xf32>
    %c0_12 = arith.constant 0 : index
    %c0_13 = arith.constant 0 : index
    %17 = vector.load %arg3[%c0_12, %c0_13] : memref<8x128xf32, #tpu.memory_space<vmem>>, vector<8x128xf32>
    tpu.vector_store %arg3[%c0_12, %c0_13], %16 {strides = array<i32>} : memref<8x128xf32, #tpu.memory_space<vmem>>, vector<8x128xf32>,
    return
  }
  func.func @transform_0(%arg0: i32) -> (i32, i32) {
    %c0_i32 = arith.constant 0 : i32
    %c0_i32_0 = arith.constant 0 : i32
    %c0_i32_1 = arith.constant 0 : i32
    return %c0_i32, %c0_i32_0 : i32, i32
  }
  func.func @transform_1(%arg0: i32) -> (i32, i32) {
    %c0_i32 = arith.constant 0 : i32
    %c0_i32_0 = arith.constant 0 : i32
    %c0_i32_1 = arith.constant 0 : i32
    return %c0_i32, %c0_i32_0 : i32, i32
  }
  func.func @transform_2(%arg0: i32) -> (i32, i32) {
    %c0_i32 = arith.constant 0 : i32
    %c0_i32_0 = arith.constant 0 : i32
    %c0_i32_1 = arith.constant 0 : i32
    return %c0_i32, %c0_i32_0 : i32, i32
  }
}

</mosaic_0001>

<llo_original>
// kernel: tpu_custom_call.1
$region0: #{tpu_custom_call.1}
  #allocation0 [shape = 'u32[]', space=smem, size = 0x4, offset = 0x4, fixed_abs, tag = 'smem constant byte address 0x4 - core index']
  #allocation1 [shape = 'u32[144,128]{1,0:T(1,128)}', space=vmem, size = 0x12000, scoped, tag = 'internal scratch']
  %s0 = inlined_call_operand.hbm [shape: f32[256,128], index: 0, kind: input, shape index: {}]
  %s1 = inlined_call_operand.hbm [shape: f32[272,128], index: 1, kind: input, shape index: {}]
  %s2 = inlined_call_operand.hbm [shape: f32[8,128], index: 2, kind: output, shape index: {}]
  %s3 = sld [smem:[#allocation0]]
  $region26: #{tpu_custom_call.1} parent=0
    _
  %s5 = ssub.s32 1, %s3
  %s6 = scalar_select 0, %s5, %s3
  $region1: #{tpu_custom_call.1} parent=0
    #allocation2 [shape = 'u8[131072]{0}', space=vmem, size = 0x20000, scoped, tag = 'input window, operand 0, single buffered']
    #allocation3 [shape = 's32[1]{0}', space=sflag, size = 0x4, scoped, tag = 'scoped memory for tpu_custom_call.1']
    #allocation4 [shape = 's32[1]{0}', space=sflag, size = 0x4, scoped, tag = 'scoped memory for tpu_custom_call.1']
    #allocation5 [shape = 'u8[139264]{0}', space=vmem, size = 0x22000, scoped, tag = 'input window, operand 1, single buffered']
    #allocation6 [shape = 's32[1]{0}', space=sflag, size = 0x4, scoped, tag = 'scoped memory for tpu_custom_call.1']
    #allocation7 [shape = 'u8[4096]{0}', space=vmem, size = 0x1000, scoped, tag = 'output window, operand 0, single buffered']
    %7 = vsyncpa [#allocation3], 0
    %8 = vsyncpa [#allocation6], 0
    %9 = vsyncpa [#allocation4], 0
    // Predicated region
    $region2: #{tpu_custom_call.1} parent=1 // pred_check
      _
    $region3: #{tpu_custom_call.1} parent=1 // pred_check_branch
      %11 = sbr.rel (0) target = $region5
    $region4: #{tpu_custom_call.1} parent=1 // pred_region
      %s13 = ssub.s32 4096, 4096
      %14 = vsyncadd [#allocation3], %s13
      %s15 = sshll.u32 [#allocation2], 4
      %s16 = int_to_ptr.vmem [resolvable:$true] %s15
      %21 = dma.hbm_to_vmem [thread:$0]  %s0, 4096, %s16, [#allocation3], 128, 128, 8
    $region5: #{tpu_custom_call.1} parent=1 // pred_fallthru
      _
    // Predicated region
    $region6: #{tpu_custom_call.1} parent=1 // pred_check
      _
    $region7: #{tpu_custom_call.1} parent=1 // pred_check_branch
      %23 = sbr.rel (0) target = $region9
    $region8: #{tpu_custom_call.1} parent=1 // pred_region
      %s25 = ssub.s32 4352, 4352
      %26 = vsyncadd [#allocation6], %s25
      %s27 = sshll.u32 [#allocation5], 4
      %s28 = int_to_ptr.vmem [resolvable:$true] %s27
      %33 = dma.hbm_to_vmem [thread:$0]  %s1, 4352, %s28, [#allocation6], 128, 128, 8
    $region9: #{tpu_custom_call.1} parent=1 // pred_fallthru
      _
    // Predicated region
    $region10: #{tpu_custom_call.1} parent=1 // pred_check
      _
    $region11: #{tpu_custom_call.1} parent=1 // pred_check_branch
      %35 = sbr.rel (0) target = $region13
    $region12: #{tpu_custom_call.1} parent=1 // pred_region
      %36 = dma.done [#allocation3], 4096
    $region13: #{tpu_custom_call.1} parent=1 // pred_fallthru
      _
    // Predicated region
    $region14: #{tpu_custom_call.1} parent=1 // pred_check
      _
    $region15: #{tpu_custom_call.1} parent=1 // pred_check_branch
      %38 = sbr.rel (0) target = $region17
    $region16: #{tpu_custom_call.1} parent=1 // pred_region
      %39 = dma.done [#allocation6], 4352
    $region17: #{tpu_custom_call.1} parent=1 // pred_fallthru
      _
    %v40 = vld [vmem:[#allocation2] sm:$0xff]
    %v41 = vld [vmem:[#allocation2 + $0x8] sm:$0xff]
    %v42 = vld [vmem:[#allocation2 + $0x10] sm:$0xff]
    %v43 = vld [vmem:[#allocation2 + $0x18] sm:$0xff]
    %v44 = vld [vmem:[#allocation2 + $0x20] sm:$0xff]
    %v45 = vld [vmem:[#allocation2 + $0x28] sm:$0xff]
    %v46 = vld [vmem:[#allocation2 + $0x30] sm:$0xff]
    %v47 = vld [vmem:[#allocation2 + $0x38] sm:$0xff]
    %v48 = vld [vmem:[#allocation2 + $0x40] sm:$0xff]
    %v49 = vld [vmem:[#allocation2 + $0x48] sm:$0xff]
    %v50 = vld [vmem:[#allocation2 + $0x50] sm:$0xff]
    %v51 = vld [vmem:[#allocation2 + $0x58] sm:$0xff]
    %v52 = vld [vmem:[#allocation2 + $0x60] sm:$0xff]
    %v53 = vld [vmem:[#allocation2 + $0x68] sm:$0xff]
    %v54 = vld [vmem:[#allocation2 + $0x70] sm:$0xff]
    %v55 = vld [vmem:[#allocation2 + $0x78] sm:$0xff]
    %v56 = vld [vmem:[#allocation2 + $0x80] sm:$0xff]
    %v57 = vld [vmem:[#allocation2 + $0x88] sm:$0xff]
    %v58 = vld [vmem:[#allocation2 + $0x90] sm:$0xff]
    %v59 = vld [vmem:[#allocation2 + $0x98] sm:$0xff]
    %v60 = vld [vmem:[#allocation2 + $0xa0] sm:$0xff]
    %v61 = vld [vmem:[#allocation2 + $0xa8] sm:$0xff]
    %v62 = vld [vmem:[#allocation2 + $0xb0] sm:$0xff]
    %v63 = vld [vmem:[#allocation2 + $0xb8] sm:$0xff]
    %v64 = vld [vmem:[#allocation2 + $0xc0] sm:$0xff]
    %v65 = vld [vmem:[#allocation2 + $0xc8] sm:$0xff]
    %v66 = vld [vmem:[#allocation2 + $0xd0] sm:$0xff]
    %v67 = vld [vmem:[#allocation2 + $0xd8] sm:$0xff]
    %v68 = vld [vmem:[#allocation2 + $0xe0] sm:$0xff]
    %v69 = vld [vmem:[#allocation2 + $0xe8] sm:$0xff]
    %v70 = vld [vmem:[#allocation2 + $0xf0] sm:$0xff]
    %v71 = vld [vmem:[#allocation2 + $0xf8] sm:$0xff]
    %v72 = vld [vmem:[#allocation5] sm:$0xff]
    %v73 = vld [vmem:[#allocation5 + $0x8] sm:$0xff]
    %v74 = vld [vmem:[#allocation5 + $0x10] sm:$0xff]
    %v75 = vld [vmem:[#allocation5 + $0x18] sm:$0xff]
    %v76 = vld [vmem:[#allocation5 + $0x20] sm:$0xff]
    %v77 = vld [vmem:[#allocation5 + $0x28] sm:$0xff]
    %v78 = vld [vmem:[#allocation5 + $0x30] sm:$0xff]
    %v79 = vld [vmem:[#allocation5 + $0x38] sm:$0xff]
    %v80 = vld [vmem:[#allocation5 + $0x40] sm:$0xff]
    %v81 = vld [vmem:[#allocation5 + $0x48] sm:$0xff]
    %v82 = vld [vmem:[#allocation5 + $0x50] sm:$0xff]
    %v83 = vld [vmem:[#allocation5 + $0x58] sm:$0xff]
    %v84 = vld [vmem:[#allocation5 + $0x60] sm:$0xff]
    %v85 = vld [vmem:[#allocation5 + $0x68] sm:$0xff]
    %v86 = vld [vmem:[#allocation5 + $0x70] sm:$0xff]
    %v87 = vld [vmem:[#allocation5 + $0x78] sm:$0xff]
    %v88 = vld [vmem:[#allocation5 + $0x80] sm:$0xff]
    %v89 = vld [vmem:[#allocation5 + $0x88] sm:$0xff]
    %v90 = vld [vmem:[#allocation5 + $0x90] sm:$0xff]
    %v91 = vld [vmem:[#allocation5 + $0x98] sm:$0xff]
    %v92 = vld [vmem:[#allocation5 + $0xa0] sm:$0xff]
    %v93 = vld [vmem:[#allocation5 + $0xa8] sm:$0xff]
    %v94 = vld [vmem:[#allocation5 + $0xb0] sm:$0xff]
    %v95 = vld [vmem:[#allocation5 + $0xb8] sm:$0xff]
    %v96 = vld [vmem:[#allocation5 + $0xc0] sm:$0xff]
    %v97 = vld [vmem:[#allocation5 + $0xc8] sm:$0xff]
    %v98 = vld [vmem:[#allocation5 + $0xd0] sm:$0xff]
    %v99 = vld [vmem:[#allocation5 + $0xd8] sm:$0xff]
    %v100 = vld [vmem:[#allocation5 + $0xe0] sm:$0xff]
    %v101 = vld [vmem:[#allocation5 + $0xe8] sm:$0xff]
    %v102 = vld [vmem:[#allocation5 + $0xf0] sm:$0xff]
    %v103 = vld [vmem:[#allocation5 + $0xf8] sm:$0xff]
    %v104 = vld [vmem:[#allocation5 + $0x100] sm:$0x1]
    %v105 = vld [vmem:[#allocation5 + $0x108] sm:$0x1]
    %106 = vmatprep.subr.mxu0 0.0
    %107 = vmatpush1.msra.mxu0 %v56
    %108 = vmatprep.subr.mxu0 0.0
    %109 = vmatpush1.msra.mxu0 %v57
    %110 = vmatprep.subr.mxu0 0.0
    %111 = vmatpush1.msra.mxu0 %v58
    %112 = vmatprep.subr.mxu0 0.0
    %113 = vmatpush1.msra.mxu0 %v59
    %114 = vmatprep.subr.mxu0 0.0
    %115 = vmatpush1.msra.mxu0 %v60
    %116 = vmatprep.subr.mxu0 0.0
    %117 = vmatpush1.msra.mxu0 %v61
    %118 = vmatprep.subr.mxu0 0.0
    %119 = vmatpush1.msra.mxu0 %v62
    %120 = vmatprep.subr.mxu0 0.0
    %121 = vmatpush1.msra.mxu0 %v63
    %122 = vmatprep.subr.mxu0 0.0
    %123 = vmatpush1.msra.mxu0 %v64
    %124 = vmatprep.subr.mxu0 0.0
    %125 = vmatpush1.msra.mxu0 %v65
    %126 = vmatprep.subr.mxu0 0.0
    %127 = vmatpush1.msra.mxu0 %v66
    %128 = vmatprep.subr.mxu0 0.0
    %129 = vmatpush1.msra.mxu0 %v67
    %130 = vmatprep.subr.mxu0 0.0
    %131 = vmatpush1.msra.mxu0 %v68
    %132 = vmatprep.subr.mxu0 0.0
    %133 = vmatpush1.msra.mxu0 %v69
    %134 = vmatprep.subr.mxu0 0.0
    %135 = vmatpush1.msra.mxu0 %v70
    %136 = vmatprep.subr.mxu0 0.0
    %137 = vmatpush1.msra.mxu0 %v71
    %138 = vmatprep.subr.mxu0 0.0
    %139 = vmatpush1.msra.mxu0 0.0
    %140 = vmatprep.subr.mxu0 0.0
    %141 = vmatpush1.msra.mxu0 0.0
    %142 = vmatprep.subr.mxu0 0.0
    %143 = vmatpush1.msra.mxu0 0.0
    %144 = vmatprep.subr.mxu0 0.0
    %145 = vmatpush1.msra.mxu0 0.0
    %146 = vmatprep.subr.mxu0 0.0
    %147 = vmatpush1.msra.mxu0 0.0
    %148 = vmatprep.subr.mxu0 0.0
    %149 = vmatpush1.msra.mxu0 0.0
    %150 = vmatprep.subr.mxu0 0.0
    %151 = vmatpush1.msra.mxu0 0.0
    %152 = vmatprep.subr.mxu0 0.0
    %153 = vmatpush1.msra.mxu0 0.0
    %154 = vmatprep.subr.mxu0 0.0
    %155 = vmatpush1.msra.mxu0 0.0
    %156 = vmatprep.subr.mxu0 0.0
    %157 = vmatpush1.msra.mxu0 0.0
    %158 = vmatprep.subr.mxu0 0.0
    %159 = vmatpush1.msra.mxu0 0.0
    %160 = vmatprep.subr.mxu0 0.0
    %161 = vmatpush1.msra.mxu0 0.0
    %162 = vmatprep.subr.mxu0 0.0
    %163 = vmatpush1.msra.mxu0 0.0
    %164 = vmatprep.subr.mxu0 0.0
    %165 = vmatpush1.msra.mxu0 0.0
    %166 = vmatprep.subr.mxu0 0.0
    %167 = vmatpush1.msra.mxu0 0.0
    %168 = vmatprep.subr.mxu0 0.0
    %169 = vmatpush1.msra.mxu0 0.0
    %170 = vmatprep.mubr.f32.mxu0 0.0
    %171 = vmatmul.mubr.f32.gmra.mrb[0].mxu0 %v40
    %v172 = vpop.f32.mrb[0].mxu0
    %v173 = vadd.f32 0.0, %v172
    %v174 = vpop.f32.mrb[0].mxu0
    %175 = vmatprep.mubr.f32.mxu0 0.0
    %176 = vmatmul.mubr.f32.gmra.mrb[0].mxu0 %v41
    %v177 = vpop.f32.mrb[0].mxu0
    %v178 = vadd.f32 0.0, %v177
    %v179 = vpop.f32.mrb[0].mxu0
    %180 = vmatprep.mubr.f32.mxu0 0.0
    %181 = vmatmul.mubr.f32.gmra.mrb[0].mxu0 %v42
    %v182 = vpop.f32.mrb[0].mxu0
    %v183 = vadd.f32 0.0, %v182
    %v184 = vpop.f32.mrb[0].mxu0
    %185 = vmatprep.mubr.f32.mxu0 0.0
    %186 = vmatmul.mubr.f32.gmra.mrb[0].mxu0 %v43
    %v187 = vpop.f32.mrb[0].mxu0
    %v188 = vadd.f32 0.0, %v187
    %v189 = vpop.f32.mrb[0].mxu0
    %190 = vmatprep.mubr.f32.mxu0 0.0
    %191 = vmatmul.mubr.f32.gmra.mrb[0].mxu0 %v44
    %v192 = vpop.f32.mrb[0].mxu0
    %v193 = vadd.f32 0.0, %v192
    %v194 = vpop.f32.mrb[0].mxu0
    %195 = vmatprep.mubr.f32.mxu0 0.0
    %196 = vmatmul.mubr.f32.gmra.mrb[0].mxu0 %v45
    %v197 = vpop.f32.mrb[0].mxu0
    %v198 = vadd.f32 0.0, %v197
    %v199 = vpop.f32.mrb[0].mxu0
    %200 = vmatprep.mubr.f32.mxu0 0.0
    %201 = vmatmul.mubr.f32.gmra.mrb[0].mxu0 %v46
    %v202 = vpop.f32.mrb[0].mxu0
    %v203 = vadd.f32 0.0, %v202
    %v204 = vpop.f32.mrb[0].mxu0
    %205 = vmatprep.mubr.f32.mxu0 0.0
    %206 = vmatmul.mubr.f32.gmra.mrb[0].mxu0 %v47
    %v207 = vpop.f32.mrb[0].mxu0
    %v208 = vadd.f32 0.0, %v207
    %v209 = vpop.f32.mrb[0].mxu0
    %210 = vmatprep.mubr.f32.mxu0 0.0
    %211 = vmatmul.mubr.f32.gmra.mrb[0].mxu0 %v48
    %v212 = vpop.f32.mrb[0].mxu0
    %v213 = vadd.f32 0.0, %v212
    %v214 = vpop.f32.mrb[0].mxu0
    %215 = vmatprep.mubr.f32.mxu0 0.0
    %216 = vmatmul.mubr.f32.gmra.mrb[0].mxu0 %v49
    %v217 = vpop.f32.mrb[0].mxu0
    %v218 = vadd.f32 0.0, %v217
    %v219 = vpop.f32.mrb[0].mxu0
    %220 = vmatprep.mubr.f32.mxu0 0.0
    %221 = vmatmul.mubr.f32.gmra.mrb[0].mxu0 %v50
    %v222 = vpop.f32.mrb[0].mxu0
    %v223 = vadd.f32 0.0, %v222
    %v224 = vpop.f32.mrb[0].mxu0
    %225 = vmatprep.mubr.f32.mxu0 0.0
    %226 = vmatmul.mubr.f32.gmra.mrb[0].mxu0 %v51
    %v227 = vpop.f32.mrb[0].mxu0
    %v228 = vadd.f32 0.0, %v227
    %v229 = vpop.f32.mrb[0].mxu0
    %230 = vmatprep.mubr.f32.mxu0 0.0
    %231 = vmatmul.mubr.f32.gmra.mrb[0].mxu0 %v52
    %v232 = vpop.f32.mrb[0].mxu0
    %v233 = vadd.f32 0.0, %v232
    %v234 = vpop.f32.mrb[0].mxu0
    %235 = vmatprep.mubr.f32.mxu0 0.0
    %236 = vmatmul.mubr.f32.gmra.mrb[0].mxu0 %v53
    %v237 = vpop.f32.mrb[0].mxu0
    %v238 = vadd.f32 0.0, %v237
    %v239 = vpop.f32.mrb[0].mxu0
    %240 = vmatprep.mubr.f32.mxu0 0.0
    %241 = vmatmul.mubr.f32.gmra.mrb[0].mxu0 %v54
    %v242 = vpop.f32.mrb[0].mxu0
    %v243 = vadd.f32 0.0, %v242
    %v244 = vpop.f32.mrb[0].mxu0
    %245 = vmatprep.mubr.f32.mxu0 0.0
    %246 = vmatmul.mubr.f32.gmra.mrb[0].mxu0 %v55
    %v247 = vpop.f32.mrb[0].mxu0
    %v248 = vadd.f32 0.0, %v247
    %v249 = vpop.f32.mrb[0].mxu0
    %250 = vdwg.mxu0
    %v251 = vlaneseq
    %v252 = vshrl.u32 %v251, 7
    %v253 = vsub.s32 0, %v252
    %v254 = vrot.slane %v104, %v253
    %255 = vmatprep.subr.mxu0 0.0
    %256 = vmatpush1.msra.mxu0 %v72
    %257 = vmatprep.subr.mxu0 0.0
    %258 = vmatpush1.msra.mxu0 %v73
    %259 = vmatprep.subr.mxu0 0.0
    %260 = vmatpush1.msra.mxu0 %v74
    %261 = vmatprep.subr.mxu0 0.0
    %262 = vmatpush1.msra.mxu0 %v75
    %263 = vmatprep.subr.mxu0 0.0
    %264 = vmatpush1.msra.mxu0 %v76
    %265 = vmatprep.subr.mxu0 0.0
    %266 = vmatpush1.msra.mxu0 %v77
    %267 = vmatprep.subr.mxu0 0.0
    %268 = vmatpush1.msra.mxu0 %v78
    %269 = vmatprep.subr.mxu0 0.0
    %270 = vmatpush1.msra.mxu0 %v79
    %271 = vmatprep.subr.mxu0 0.0
    %272 = vmatpush1.msra.mxu0 %v80
    %273 = vmatprep.subr.mxu0 0.0
    %274 = vmatpush1.msra.mxu0 %v81
    %275 = vmatprep.subr.mxu0 0.0
    %276 = vmatpush1.msra.mxu0 %v82
    %277 = vmatprep.subr.mxu0 0.0
    %278 = vmatpush1.msra.mxu0 %v83
    %279 = vmatprep.subr.mxu0 0.0
    %280 = vmatpush1.msra.mxu0 %v84
    %281 = vmatprep.subr.mxu0 0.0
    %282 = vmatpush1.msra.mxu0 %v85
    %283 = vmatprep.subr.mxu0 0.0
    %284 = vmatpush1.msra.mxu0 %v86
    %285 = vmatprep.subr.mxu0 0.0
    %286 = vmatpush1.msra.mxu0 %v87
    %287 = vmatprep.subr.mxu0 0.0
    %288 = vmatpush1.msra.mxu0 0.0
    %289 = vmatprep.subr.mxu0 0.0
    %290 = vmatpush1.msra.mxu0 0.0
    %291 = vmatprep.subr.mxu0 0.0
    %292 = vmatpush1.msra.mxu0 0.0
    %293 = vmatprep.subr.mxu0 0.0
    %294 = vmatpush1.msra.mxu0 0.0
    %295 = vmatprep.subr.mxu0 0.0
    %296 = vmatpush1.msra.mxu0 0.0
    %297 = vmatprep.subr.mxu0 0.0
    %298 = vmatpush1.msra.mxu0 0.0
    %299 = vmatprep.subr.mxu0 0.0
    %300 = vmatpush1.msra.mxu0 0.0
    %301 = vmatprep.subr.mxu0 0.0
    %302 = vmatpush1.msra.mxu0 0.0
    %303 = vmatprep.subr.mxu0 0.0
    %304 = vmatpush1.msra.mxu0 0.0
    %305 = vmatprep.subr.mxu0 0.0
    %306 = vmatpush1.msra.mxu0 0.0
    %307 = vmatprep.subr.mxu0 0.0
    %308 = vmatpush1.msra.mxu0 0.0
    %309 = vmatprep.subr.mxu0 0.0
    %310 = vmatpush1.msra.mxu0 0.0
    %311 = vmatprep.subr.mxu0 0.0
    %312 = vmatpush1.msra.mxu0 0.0
    %313 = vmatprep.subr.mxu0 0.0
    %314 = vmatpush1.msra.mxu0 0.0
    %315 = vmatprep.subr.mxu0 0.0
    %316 = vmatpush1.msra.mxu0 0.0
    %317 = vmatprep.subr.mxu0 0.0
    %318 = vmatpush1.msra.mxu0 0.0
    %319 = vmatprep.mubr.f32.mxu0 0.0
    %320 = vmatmul.mubr.f32.gmra.mrb[0].mxu0 %v173
    %v321 = vpop.f32.mrb[0].mxu0
    %v322 = vadd.f32 %v254, %v321
    %v323 = vpop.f32.mrb[0].mxu0
    %324 = vmatprep.mubr.f32.mxu0 0.0
    %325 = vmatmul.mubr.f32.gmra.mrb[0].mxu0 %v178
    %v326 = vpop.f32.mrb[0].mxu0
    %v327 = vadd.f32 %v254, %v326
    %v328 = vpop.f32.mrb[0].mxu0
    %329 = vmatprep.mubr.f32.mxu0 0.0
    %330 = vmatmul.mubr.f32.gmra.mrb[0].mxu0 %v183
    %v331 = vpop.f32.mrb[0].mxu0
    %v332 = vadd.f32 %v254, %v331
    %v333 = vpop.f32.mrb[0].mxu0
    %334 = vmatprep.mubr.f32.mxu0 0.0
    %335 = vmatmul.mubr.f32.gmra.mrb[0].mxu0 %v188
    %v336 = vpop.f32.mrb[0].mxu0
    %v337 = vadd.f32 %v254, %v336
    %v338 = vpop.f32.mrb[0].mxu0
    %339 = vmatprep.mubr.f32.mxu0 0.0
    %340 = vmatmul.mubr.f32.gmra.mrb[0].mxu0 %v193
    %v341 = vpop.f32.mrb[0].mxu0
    %v342 = vadd.f32 %v254, %v341
    %v343 = vpop.f32.mrb[0].mxu0
    %344 = vmatprep.mubr.f32.mxu0 0.0
    %345 = vmatmul.mubr.f32.gmra.mrb[0].mxu0 %v198
    %v346 = vpop.f32.mrb[0].mxu0
    %v347 = vadd.f32 %v254, %v346
    %v348 = vpop.f32.mrb[0].mxu0
    %349 = vmatprep.mubr.f32.mxu0 0.0
    %350 = vmatmul.mubr.f32.gmra.mrb[0].mxu0 %v203
    %v351 = vpop.f32.mrb[0].mxu0
    %v352 = vadd.f32 %v254, %v351
    %v353 = vpop.f32.mrb[0].mxu0
    %354 = vmatprep.mubr.f32.mxu0 0.0
    %355 = vmatmul.mubr.f32.gmra.mrb[0].mxu0 %v208
    %v356 = vpop.f32.mrb[0].mxu0
    %v357 = vadd.f32 %v254, %v356
    %v358 = vpop.f32.mrb[0].mxu0
    %359 = vmatprep.mubr.f32.mxu0 0.0
    %360 = vmatmul.mubr.f32.gmra.mrb[0].mxu0 %v213
    %v361 = vpop.f32.mrb[0].mxu0
    %v362 = vadd.f32 %v254, %v361
    %v363 = vpop.f32.mrb[0].mxu0
    %364 = vmatprep.mubr.f32.mxu0 0.0
    %365 = vmatmul.mubr.f32.gmra.mrb[0].mxu0 %v218
    %v366 = vpop.f32.mrb[0].mxu0
    %v367 = vadd.f32 %v254, %v366
    %v368 = vpop.f32.mrb[0].mxu0
    %369 = vmatprep.mubr.f32.mxu0 0.0
    %370 = vmatmul.mubr.f32.gmra.mrb[0].mxu0 %v223
    %v371 = vpop.f32.mrb[0].mxu0
    %v372 = vadd.f32 %v254, %v371
    %v373 = vpop.f32.mrb[0].mxu0
    %374 = vmatprep.mubr.f32.mxu0 0.0
    %375 = vmatmul.mubr.f32.gmra.mrb[0].mxu0 %v228
    %v376 = vpop.f32.mrb[0].mxu0
    %v377 = vadd.f32 %v254, %v376
    %v378 = vpop.f32.mrb[0].mxu0
    %379 = vmatprep.mubr.f32.mxu0 0.0
    %380 = vmatmul.mubr.f32.gmra.mrb[0].mxu0 %v233
    %v381 = vpop.f32.mrb[0].mxu0
    %v382 = vadd.f32 %v254, %v381
    %v383 = vpop.f32.mrb[0].mxu0
    %384 = vmatprep.mubr.f32.mxu0 0.0
    %385 = vmatmul.mubr.f32.gmra.mrb[0].mxu0 %v238
    %v386 = vpop.f32.mrb[0].mxu0
    %v387 = vadd.f32 %v254, %v386
    %v388 = vpop.f32.mrb[0].mxu0
    %389 = vmatprep.mubr.f32.mxu0 0.0
    %390 = vmatmul.mubr.f32.gmra.mrb[0].mxu0 %v243
    %v391 = vpop.f32.mrb[0].mxu0
    %v392 = vadd.f32 %v254, %v391
    %v393 = vpop.f32.mrb[0].mxu0
    %394 = vmatprep.mubr.f32.mxu0 0.0
    %395 = vmatmul.mubr.f32.gmra.mrb[0].mxu0 %v248
    %v396 = vpop.f32.mrb[0].mxu0
    %v397 = vadd.f32 %v254, %v396
    %v398 = vpop.f32.mrb[0].mxu0
    %399 = vdwg.mxu0
    %v400 = vmax.f32 %v322, 0.0
    %v401 = vmax.f32 %v327, 0.0
    %v402 = vmax.f32 %v332, 0.0
    %v403 = vmax.f32 %v337, 0.0
    %v404 = vmax.f32 %v342, 0.0
    %v405 = vmax.f32 %v347, 0.0
    %v406 = vmax.f32 %v352, 0.0
    %v407 = vmax.f32 %v357, 0.0
    %v408 = vmax.f32 %v362, 0.0
    %v409 = vmax.f32 %v367, 0.0
    %v410 = vmax.f32 %v372, 0.0
    %v411 = vmax.f32 %v377, 0.0
    %v412 = vmax.f32 %v382, 0.0
    %v413 = vmax.f32 %v387, 0.0
    %v414 = vmax.f32 %v392, 0.0
    %v415 = vmax.f32 %v397, 0.0
    %416 = vmatprep.subr.mxu0 0.0
    %417 = vmatpush1.msra.mxu0 %v88
    %418 = vmatprep.subr.mxu0 0.0
    %419 = vmatpush1.msra.mxu0 %v89
    %420 = vmatprep.subr.mxu0 0.0
    %421 = vmatpush1.msra.mxu0 %v90
    %422 = vmatprep.subr.mxu0 0.0
    %423 = vmatpush1.msra.mxu0 %v91
    %424 = vmatprep.subr.mxu0 0.0
    %425 = vmatpush1.msra.mxu0 %v92
    %426 = vmatprep.subr.mxu0 0.0
    %427 = vmatpush1.msra.mxu0 %v93
    %428 = vmatprep.subr.mxu0 0.0
    %429 = vmatpush1.msra.mxu0 %v94
    %430 = vmatprep.subr.mxu0 0.0
    %431 = vmatpush1.msra.mxu0 %v95
    %432 = vmatprep.subr.mxu0 0.0
    %433 = vmatpush1.msra.mxu0 %v96
    %434 = vmatprep.subr.mxu0 0.0
    %435 = vmatpush1.msra.mxu0 %v97
    %436 = vmatprep.subr.mxu0 0.0
    %437 = vmatpush1.msra.mxu0 %v98
    %438 = vmatprep.subr.mxu0 0.0
    %439 = vmatpush1.msra.mxu0 %v99
    %440 = vmatprep.subr.mxu0 0.0
    %441 = vmatpush1.msra.mxu0 %v100
    %442 = vmatprep.subr.mxu0 0.0
    %443 = vmatpush1.msra.mxu0 %v101
    %444 = vmatprep.subr.mxu0 0.0
    %445 = vmatpush1.msra.mxu0 %v102
    %446 = vmatprep.subr.mxu0 0.0
    %447 = vmatpush1.msra.mxu0 %v103
    %448 = vmatprep.subr.mxu0 0.0
    %449 = vmatpush1.msra.mxu0 0.0
    %450 = vmatprep.subr.mxu0 0.0
    %451 = vmatpush1.msra.mxu0 0.0
    %452 = vmatprep.subr.mxu0 0.0
    %453 = vmatpush1.msra.mxu0 0.0
    %454 = vmatprep.subr.mxu0 0.0
    %455 = vmatpush1.msra.mxu0 0.0
    %456 = vmatprep.subr.mxu0 0.0
    %457 = vmatpush1.msra.mxu0 0.0
    %458 = vmatprep.subr.mxu0 0.0
    %459 = vmatpush1.msra.mxu0 0.0
    %460 = vmatprep.subr.mxu0 0.0
    %461 = vmatpush1.msra.mxu0 0.0
    %462 = vmatprep.subr.mxu0 0.0
    %463 = vmatpush1.msra.mxu0 0.0
    %464 = vmatprep.subr.mxu0 0.0
    %465 = vmatpush1.msra.mxu0 0.0
    %466 = vmatprep.subr.mxu0 0.0
    %467 = vmatpush1.msra.mxu0 0.0
    %468 = vmatprep.subr.mxu0 0.0
    %469 = vmatpush1.msra.mxu0 0.0
    %470 = vmatprep.subr.mxu0 0.0
    %471 = vmatpush1.msra.mxu0 0.0
    %472 = vmatprep.subr.mxu0 0.0
    %473 = vmatpush1.msra.mxu0 0.0
    %474 = vmatprep.subr.mxu0 0.0
    %475 = vmatpush1.msra.mxu0 0.0
    %476 = vmatprep.subr.mxu0 0.0
    %477 = vmatpush1.msra.mxu0 0.0
    %478 = vmatprep.subr.mxu0 0.0
    %479 = vmatpush1.msra.mxu0 0.0
    %480 = vmatprep.mubr.f32.mxu0 0.0
    %481 = vmatmul.mubr.f32.gmra.mrb[0].mxu0 %v400
    %v482 = vpop.f32.mrb[0].mxu0
    %v483 = vadd.f32 0.0, %v482
    %v484 = vpop.f32.mrb[0].mxu0
    %485 = vmatprep.mubr.f32.mxu0 0.0
    %486 = vmatmul.mubr.f32.gmra.mrb[0].mxu0 %v401
    %v487 = vpop.f32.mrb[0].mxu0
    %v488 = vadd.f32 0.0, %v487
    %v489 = vpop.f32.mrb[0].mxu0
    %490 = vmatprep.mubr.f32.mxu0 0.0
    %491 = vmatmul.mubr.f32.gmra.mrb[0].mxu0 %v402
    %v492 = vpop.f32.mrb[0].mxu0
    %v493 = vadd.f32 0.0, %v492
    %v494 = vpop.f32.mrb[0].mxu0
    %495 = vmatprep.mubr.f32.mxu0 0.0
    %496 = vmatmul.mubr.f32.gmra.mrb[0].mxu0 %v403
    %v497 = vpop.f32.mrb[0].mxu0
    %v498 = vadd.f32 0.0, %v497
    %v499 = vpop.f32.mrb[0].mxu0
    %500 = vmatprep.mubr.f32.mxu0 0.0
    %501 = vmatmul.mubr.f32.gmra.mrb[0].mxu0 %v404
    %v502 = vpop.f32.mrb[0].mxu0
    %v503 = vadd.f32 0.0, %v502
    %v504 = vpop.f32.mrb[0].mxu0
    %505 = vmatprep.mubr.f32.mxu0 0.0
    %506 = vmatmul.mubr.f32.gmra.mrb[0].mxu0 %v405
    %v507 = vpop.f32.mrb[0].mxu0
    %v508 = vadd.f32 0.0, %v507
    %v509 = vpop.f32.mrb[0].mxu0
    %510 = vmatprep.mubr.f32.mxu0 0.0
    %511 = vmatmul.mubr.f32.gmra.mrb[0].mxu0 %v406
    %v512 = vpop.f32.mrb[0].mxu0
    %v513 = vadd.f32 0.0, %v512
    %v514 = vpop.f32.mrb[0].mxu0
    %515 = vmatprep.mubr.f32.mxu0 0.0
    %516 = vmatmul.mubr.f32.gmra.mrb[0].mxu0 %v407
    %v517 = vpop.f32.mrb[0].mxu0
    %v518 = vadd.f32 0.0, %v517
    %v519 = vpop.f32.mrb[0].mxu0
    %520 = vmatprep.mubr.f32.mxu0 0.0
    %521 = vmatmul.mubr.f32.gmra.mrb[0].mxu0 %v408
    %v522 = vpop.f32.mrb[0].mxu0
    %v523 = vadd.f32 0.0, %v522
    %v524 = vpop.f32.mrb[0].mxu0
    %525 = vmatprep.mubr.f32.mxu0 0.0
    %526 = vmatmul.mubr.f32.gmra.mrb[0].mxu0 %v409
    %v527 = vpop.f32.mrb[0].mxu0
    %v528 = vadd.f32 0.0, %v527
    %v529 = vpop.f32.mrb[0].mxu0
    %530 = vmatprep.mubr.f32.mxu0 0.0
    %531 = vmatmul.mubr.f32.gmra.mrb[0].mxu0 %v410
    %v532 = vpop.f32.mrb[0].mxu0
    %v533 = vadd.f32 0.0, %v532
    %v534 = vpop.f32.mrb[0].mxu0
    %535 = vmatprep.mubr.f32.mxu0 0.0
    %536 = vmatmul.mubr.f32.gmra.mrb[0].mxu0 %v411
    %v537 = vpop.f32.mrb[0].mxu0
    %v538 = vadd.f32 0.0, %v537
    %v539 = vpop.f32.mrb[0].mxu0
    %540 = vmatprep.mubr.f32.mxu0 0.0
    %541 = vmatmul.mubr.f32.gmra.mrb[0].mxu0 %v412
    %v542 = vpop.f32.mrb[0].mxu0
    %v543 = vadd.f32 0.0, %v542
    %v544 = vpop.f32.mrb[0].mxu0
    %545 = vmatprep.mubr.f32.mxu0 0.0
    %546 = vmatmul.mubr.f32.gmra.mrb[0].mxu0 %v413
    %v547 = vpop.f32.mrb[0].mxu0
    %v548 = vadd.f32 0.0, %v547
    %v549 = vpop.f32.mrb[0].mxu0
    %550 = vmatprep.mubr.f32.mxu0 0.0
    %551 = vmatmul.mubr.f32.gmra.mrb[0].mxu0 %v414
    %v552 = vpop.f32.mrb[0].mxu0
    %v553 = vadd.f32 0.0, %v552
    %v554 = vpop.f32.mrb[0].mxu0
    %555 = vmatprep.mubr.f32.mxu0 0.0
    %556 = vmatmul.mubr.f32.gmra.mrb[0].mxu0 %v415
    %v557 = vpop.f32.mrb[0].mxu0
    %v558 = vadd.f32 0.0, %v557
    %v559 = vpop.f32.mrb[0].mxu0
    %560 = vdwg.mxu0
    %v561 = vlaneseq
    %v562 = vshrl.u32 %v561, 7
    %v563 = vsub.s32 0, %v562
    %v564 = vrot.slane %v105, %v563
    %565 = vmatprep.subr.mxu0 0.0
    %566 = vmatpush1.msra.mxu0 %v483
    %567 = vmatprep.subr.mxu0 0.0
    %568 = vmatpush1.msra.mxu0 %v488
    %569 = vmatprep.subr.mxu0 0.0
    %570 = vmatpush1.msra.mxu0 %v493
    %571 = vmatprep.subr.mxu0 0.0
    %572 = vmatpush1.msra.mxu0 %v498
    %573 = vmatprep.subr.mxu0 0.0
    %574 = vmatpush1.msra.mxu0 %v503
    %575 = vmatprep.subr.mxu0 0.0
    %576 = vmatpush1.msra.mxu0 %v508
    %577 = vmatprep.subr.mxu0 0.0
    %578 = vmatpush1.msra.mxu0 %v513
    %579 = vmatprep.subr.mxu0 0.0
    %580 = vmatpush1.msra.mxu0 %v518
    %581 = vmatprep.subr.mxu0 0.0
    %582 = vmatpush1.msra.mxu0 %v523
    %583 = vmatprep.subr.mxu0 0.0
    %584 = vmatpush1.msra.mxu0 %v528
    %585 = vmatprep.subr.mxu0 0.0
    %586 = vmatpush1.msra.mxu0 %v533
    %587 = vmatprep.subr.mxu0 0.0
    %588 = vmatpush1.msra.mxu0 %v538
    %589 = vmatprep.subr.mxu0 0.0
    %590 = vmatpush1.msra.mxu0 %v543
    %591 = vmatprep.subr.mxu0 0.0
    %592 = vmatpush1.msra.mxu0 %v548
    %593 = vmatprep.subr.mxu0 0.0
    %594 = vmatpush1.msra.mxu0 %v553
    %595 = vmatprep.subr.mxu0 0.0
    %596 = vmatpush1.msra.mxu0 %v558
    %597 = vmatprep.subr.mxu0 0.0
    %598 = vmatpush1.msra.mxu0 0.0
    %599 = vmatprep.subr.mxu0 0.0
    %600 = vmatpush1.msra.mxu0 0.0
    %601 = vmatprep.subr.mxu0 0.0
    %602 = vmatpush1.msra.mxu0 0.0
    %603 = vmatprep.subr.mxu0 0.0
    %604 = vmatpush1.msra.mxu0 0.0
    %605 = vmatprep.subr.mxu0 0.0
    %606 = vmatpush1.msra.mxu0 0.0
    %607 = vmatprep.subr.mxu0 0.0
    %608 = vmatpush1.msra.mxu0 0.0
    %609 = vmatprep.subr.mxu0 0.0
    %610 = vmatpush1.msra.mxu0 0.0
    %611 = vmatprep.subr.mxu0 0.0
    %612 = vmatpush1.msra.mxu0 0.0
    %613 = vmatprep.subr.mxu0 0.0
    %614 = vmatpush1.msra.mxu0 0.0
    %615 = vmatprep.subr.mxu0 0.0
    %616 = vmatpush1.msra.mxu0 0.0
    %617 = vmatprep.subr.mxu0 0.0
    %618 = vmatpush1.msra.mxu0 0.0
    %619 = vmatprep.subr.mxu0 0.0
    %620 = vmatpush1.msra.mxu0 0.0
    %621 = vmatprep.subr.mxu0 0.0
    %622 = vmatpush1.msra.mxu0 0.0
    %623 = vmatprep.subr.mxu0 0.0
    %624 = vmatpush1.msra.mxu0 0.0
    %625 = vmatprep.subr.mxu0 0.0
    %626 = vmatpush1.msra.mxu0 0.0
    %627 = vmatprep.subr.mxu0 0.0
    %628 = vmatpush1.msra.mxu0 0.0
    %629 = vmatprep.mubr.f32.mxu0 0.0
    %630 = vmatmul.mubr.f32.gmra.mrb[0].mxu0 %v40
    %v631 = vpop.f32.mrb[0].mxu0
    %v632 = vadd.f32 %v564, %v631
    %v633 = vpop.f32.mrb[0].mxu0
    %634 = vmatprep.mubr.f32.mxu0 0.0
    %635 = vmatmul.mubr.f32.gmra.mrb[0].mxu0 %v41
    %v636 = vpop.f32.mrb[0].mxu0
    %v637 = vpop.f32.mrb[0].mxu0
    %638 = vmatprep.mubr.f32.mxu0 0.0
    %639 = vmatmul.mubr.f32.gmra.mrb[0].mxu0 %v42
    %v640 = vpop.f32.mrb[0].mxu0
    %v641 = vpop.f32.mrb[0].mxu0
    %642 = vmatprep.mubr.f32.mxu0 0.0
    %643 = vmatmul.mubr.f32.gmra.mrb[0].mxu0 %v43
    %v644 = vpop.f32.mrb[0].mxu0
    %v645 = vpop.f32.mrb[0].mxu0
    %646 = vmatprep.mubr.f32.mxu0 0.0
    %647 = vmatmul.mubr.f32.gmra.mrb[0].mxu0 %v44
    %v648 = vpop.f32.mrb[0].mxu0
    %v649 = vpop.f32.mrb[0].mxu0
    %650 = vmatprep.mubr.f32.mxu0 0.0
    %651 = vmatmul.mubr.f32.gmra.mrb[0].mxu0 %v45
    %v652 = vpop.f32.mrb[0].mxu0
    %v653 = vpop.f32.mrb[0].mxu0
    %654 = vmatprep.mubr.f32.mxu0 0.0
    %655 = vmatmul.mubr.f32.gmra.mrb[0].mxu0 %v46
    %v656 = vpop.f32.mrb[0].mxu0
    %v657 = vpop.f32.mrb[0].mxu0
    %658 = vmatprep.mubr.f32.mxu0 0.0
    %659 = vmatmul.mubr.f32.gmra.mrb[0].mxu0 %v47
    %v660 = vpop.f32.mrb[0].mxu0
    %v661 = vpop.f32.mrb[0].mxu0
    %662 = vmatprep.mubr.f32.mxu0 0.0
    %663 = vmatmul.mubr.f32.gmra.mrb[0].mxu0 %v48
    %v664 = vpop.f32.mrb[0].mxu0
    %v665 = vpop.f32.mrb[0].mxu0
    %666 = vmatprep.mubr.f32.mxu0 0.0
    %667 = vmatmul.mubr.f32.gmra.mrb[0].mxu0 %v49
    %v668 = vpop.f32.mrb[0].mxu0
    %v669 = vpop.f32.mrb[0].mxu0
    %670 = vmatprep.mubr.f32.mxu0 0.0
    %671 = vmatmul.mubr.f32.gmra.mrb[0].mxu0 %v50
    %v672 = vpop.f32.mrb[0].mxu0
    %v673 = vpop.f32.mrb[0].mxu0
    %674 = vmatprep.mubr.f32.mxu0 0.0
    %675 = vmatmul.mubr.f32.gmra.mrb[0].mxu0 %v51
    %v676 = vpop.f32.mrb[0].mxu0
    %v677 = vpop.f32.mrb[0].mxu0
    %678 = vmatprep.mubr.f32.mxu0 0.0
    %679 = vmatmul.mubr.f32.gmra.mrb[0].mxu0 %v52
    %v680 = vpop.f32.mrb[0].mxu0
    %v681 = vpop.f32.mrb[0].mxu0
    %682 = vmatprep.mubr.f32.mxu0 0.0
    %683 = vmatmul.mubr.f32.gmra.mrb[0].mxu0 %v53
    %v684 = vpop.f32.mrb[0].mxu0
    %v685 = vpop.f32.mrb[0].mxu0
    %686 = vmatprep.mubr.f32.mxu0 0.0
    %687 = vmatmul.mubr.f32.gmra.mrb[0].mxu0 %v54
    %v688 = vpop.f32.mrb[0].mxu0
    %v689 = vpop.f32.mrb[0].mxu0
    %690 = vmatprep.mubr.f32.mxu0 0.0
    %691 = vmatmul.mubr.f32.gmra.mrb[0].mxu0 %v55
    %v692 = vpop.f32.mrb[0].mxu0
    %v693 = vpop.f32.mrb[0].mxu0
    %694 = vdwg.mxu0
    %695 = vst [vmem:[#allocation7] sm:$0xff] %v632
    // Predicated region
    $region18: #{tpu_custom_call.1} parent=1 // pred_check
      _
    $region19: #{tpu_custom_call.1} parent=1 // pred_check_branch
      %697 = sbr.rel (0) target = $region21
    $region20: #{tpu_custom_call.1} parent=1 // pred_region
      %s699 = ssub.s32 128, 128
      %700 = vsyncadd [#allocation4], %s699
      %s702 = sshll.u32 [#allocation7], 4
      %s703 = int_to_ptr.vmem [resolvable:$true] %s702
      %705 = dma.vmem_to_hbm [thread:$0]  %s703, 128, %s2, [#allocation4]
    $region21: #{tpu_custom_call.1} parent=1 // pred_fallthru
      _
    // Predicated region
    $region22: #{tpu_custom_call.1} parent=1 // pred_check
      _
    $region23: #{tpu_custom_call.1} parent=1 // pred_check_branch
      %707 = sbr.rel (0) target = $region25
    $region24: #{tpu_custom_call.1} parent=1 // pred_region
      %708 = dma.done [#allocation4], 128
    $region25: #{tpu_custom_call.1} parent=1 // pred_fallthru
      _
    %709 = vsyncpa [#allocation3], 1
    %710 = vsyncpa [#allocation6], 1
    %711 = vsyncpa [#allocation4], 1

</llo_original>
